<compile_context>
chip_gen: v6e
topology: v6e:2x2x1
jax: 0.10.0
libtpu: 0.0.40
codegen_flags: <defaults>
</compile_context>

<pallas_src>
import jax
import jax.numpy as jnp
from jax.experimental import pallas as pl
from jax.experimental.pallas import tpu as pltpu


def _reg_weighted_l1_kernel(ind_ref, feat_ref, mask_ref, target_ref, out_ref):
    # grid = (B,): one batch element per step; out block is a per-b partial sum.
    b = pl.program_id(0)

    feat = feat_ref[0].astype(jnp.float32)      # (C, HW)  whole per-batch slab (one DMA)
    m = mask_ref[0]                             # (C, K)   lane-dense: K in lanes
    t = target_ref[0]                           # (C, K)
    C, HW = feat.shape
    K = m.shape[1]

    lane = jax.lax.broadcasted_iota(jnp.int32, (1, HW), 1)   # lane index over HW
    kcol = jax.lax.broadcasted_iota(jnp.int32, (C, K), 1)    # column index over K

    # In-VMEM gather: for object k pick column ind[b, k] of the (C, HW) slab.
    # iota-compare + select + lane-reduce; no per-row DMA, no one-hot MXU matmul.
    # TODO(synk): for large K swap the static unroll for a fori_loop carrying pred.
    pred = jnp.zeros((C, K), jnp.float32)
    for k in range(K):                          # static unroll, K is small
        idx_k = ind_ref[b, k]                   # scalar index from SMEM (pre-clamped)
        col = jnp.sum(jnp.where(lane == idx_k, feat, 0.0), axis=1, keepdims=True)  # (C, 1)
        pred = jnp.where(kcol == k, col, pred)  # place gathered column k

    # Single vectorized masked-L1 pass over the lane-dense (C, K) tile.
    abs_sum = jnp.sum(jnp.abs(pred * m - t * m))
    msk_sum = jnp.sum(m)

    # One merged, lane-dense output write: lane 0 = sum|pred*m - t*m|, lane 1 = sum(m).
    out_lane = jax.lax.broadcasted_iota(jnp.int32, (1, 1, 128), 2)
    out_ref[...] = jnp.where(out_lane == 0, abs_sum,
                             jnp.where(out_lane == 1, msk_sum, 0.0))


def reg_weighted_l1_loss(output, mask, ind, target):
    """output: (B,C,H,W) NCHW; mask/target: (B,K,C); ind: (B,K) int indices into H*W."""
    B, C, H, W = output.shape
    K = ind.shape[1]
    HW = H * W

    # Free reshape only -- no transpose of the big slab (gather handles the layout).
    feat = output.reshape(B, C, HW)
    # Hoisted clamp (matches JAX gather clamp semantics; PyTorch would error on OOB).
    ind_i32 = jnp.clip(ind.astype(jnp.int32), 0, HW - 1)
    # Tiny (B,K,C)->(B,C,K) transposes so the in-kernel tile is lane-dense in K.
    mask_ck = jnp.transpose(mask.astype(jnp.float32), (0, 2, 1))
    target_ck = jnp.transpose(target.astype(jnp.float32), (0, 2, 1))

    partials = pl.pallas_call(
        _reg_weighted_l1_kernel,
        out_shape=jax.ShapeDtypeStruct((B, 1, 128), jnp.float32),
        grid_spec=pltpu.PrefetchScalarGridSpec(
            num_scalar_prefetch=1,                                   # ind lands in SMEM
            grid=(B,),
            in_specs=[
                pl.BlockSpec((1, C, HW), lambda b, ind_r: (b, 0, 0)),  # per-batch slab (auto-pipelined)
                pl.BlockSpec((1, C, K), lambda b, ind_r: (b, 0, 0)),   # mask  (C,K)
                pl.BlockSpec((1, C, K), lambda b, ind_r: (b, 0, 0)),   # target (C,K)
            ],
            out_specs=pl.BlockSpec((1, 1, 128), lambda b, ind_r: (b, 0, 0)),
        ),
        compiler_params=pltpu.CompilerParams(
            dimension_semantics=("parallel",)),                      # per-b partials independent (v7x megacore)
    )(ind_i32, feat, mask_ck, target_ck)

    abs_total = jnp.sum(partials[:, 0, 0])
    msk_total = jnp.sum(partials[:, 0, 1])
    return abs_total / (msk_total + 1e-4)


def _reference(output, mask, ind, target):
    B, C, H, W = output.shape
    K = ind.shape[1]
    feat = jnp.transpose(output, (0, 2, 3, 1)).reshape(B, H * W, C)
    idx = jnp.broadcast_to(ind[:, :, None].astype(jnp.int32), (B, K, C))
    pred = jnp.take_along_axis(feat, idx, axis=1)
    m = mask.astype(jnp.float32)
    loss = jnp.sum(jnp.abs(pred * m - target * m))
    return loss / (jnp.sum(m) + 1e-4)


if __name__ == "__main__":
    # Small shapes consistent with the module: B=2, C=4, H=W=16, K=8 objects.
    B, C, H, W, K = 2, 4, 16, 16, 8
    key = jax.random.PRNGKey(0)
    k1, k2, k3, k4 = jax.random.split(key, 4)

    output = jax.random.normal(k1, (B, C, H, W), dtype=jnp.float32)
    target = jax.random.normal(k2, (B, K, C), dtype=jnp.float32)
    ind = jax.random.randint(k3, (B, K), 0, H * W, dtype=jnp.int32)
    mask = (jax.random.uniform(k4, (B, K, C)) > 0.3).astype(jnp.float32)

    loss = reg_weighted_l1_loss(output, mask, ind, target)
    jax.block_until_ready(loss)

    ref = _reference(output, mask, ind, target)
    assert jnp.allclose(loss, ref, rtol=1e-5, atol=1e-5), (loss, ref)
    print("KERNEL_OK")
</pallas_src>

<mosaic_0001>
module attributes {stable_mosaic.version = 11 : i64} {
  func.func @_reg_weighted_l1_kernel(%arg0: i32, %arg1: memref<2x8xi32, #tpu.memory_space<smem>>, %arg2: memref<1x4x256xf32, #tpu.memory_space<vmem>>, %arg3: memref<1x4x8xf32, #tpu.memory_space<vmem>>, %arg4: memref<1x4x8xf32, #tpu.memory_space<vmem>>, %arg5: memref<1x1x128xf32, #tpu.memory_space<vmem>>) attributes {dimension_semantics = [#tpu.dimension_semantics<parallel>], iteration_bounds = array<i64: 2>, scalar_prefetch = 1 : i64, scratch_operands = 0 : i64, tpu.core_type = #tpu.core_type<tc>, window_params = [{transform_indices = @transform_0, window_bounds = array<i64: 1, 4, 256>}, {transform_indices = @transform_1, window_bounds = array<i64: 1, 4, 8>}, {transform_indices = @transform_2, window_bounds = array<i64: 1, 4, 8>}, {transform_indices = @transform_3, window_bounds = array<i64: 1, 1, 128>}]} {
    %c0 = arith.constant 0 : index
    %c0_0 = arith.constant 0 : index
    %c0_1 = arith.constant 0 : index
    %0 = vector.load %arg2[%c0, %c0_0, %c0_1] : memref<1x4x256xf32, #tpu.memory_space<vmem>>, vector<1x4x256xf32>
    %1 = vector.shape_cast %0 : vector<1x4x256xf32> to vector<4x256xf32>
    %c0_2 = arith.constant 0 : index
    %c0_3 = arith.constant 0 : index
    %c0_4 = arith.constant 0 : index
    %2 = vector.load %arg3[%c0_2, %c0_3, %c0_4] : memref<1x4x8xf32, #tpu.memory_space<vmem>>, vector<1x4x8xf32>
    %3 = vector.shape_cast %2 : vector<1x4x8xf32> to vector<4x8xf32>
    %c0_5 = arith.constant 0 : index
    %c0_6 = arith.constant 0 : index
    %c0_7 = arith.constant 0 : index
    %4 = vector.load %arg4[%c0_5, %c0_6, %c0_7] : memref<1x4x8xf32, #tpu.memory_space<vmem>>, vector<1x4x8xf32>
    %5 = vector.shape_cast %4 : vector<1x4x8xf32> to vector<4x8xf32>
    %6 = tpu.iota {dimensions = array<i32: 1>} : vector<1x256xi32>
    %7 = tpu.iota {dimensions = array<i32: 1>} : vector<4x8xi32>
    %cst = arith.constant 0.000000e+00 : f32
    %8 = vector.broadcast %cst : f32 to vector<4x8xf32>
    %9 = arith.index_cast %arg0 : i32 to index
    %c0_8 = arith.constant 0 : index
    %10 = memref.load %arg1[%9, %c0_8] : memref<2x8xi32, #tpu.memory_space<smem>>
    %11 = vector.broadcast %10 : i32 to vector<1x256xi32>
    %12 = arith.cmpi eq, %6, %11 : vector<1x256xi32>
    %cst_9 = arith.constant 0.000000e+00 : f32
    %13 = vector.shape_cast %12 : vector<1x256xi1> to vector<1x256xi1>
    %14 = vector.broadcast %13 : vector<1x256xi1> to vector<4x256xi1>
    %15 = vector.broadcast %cst_9 : f32 to vector<4x256xf32>
    %16 = arith.select %14, %1, %15 : vector<4x256xi1>, vector<4x256xf32>
    %cst_10 = arith.constant dense<0.000000e+00> : vector<4xf32>
    %17 = vector.multi_reduction <add>, %16, %cst_10 [1] : vector<4x256xf32> to vector<4xf32>
    %18 = vector.shape_cast %17 : vector<4xf32> to vector<4x1xf32>
    %c0_i32 = arith.constant 0 : i32
    %19 = vector.broadcast %c0_i32 : i32 to vector<4x8xi32>
    %20 = arith.cmpi eq, %7, %19 : vector<4x8xi32>
    %21 = vector.shape_cast %18 : vector<4x1xf32> to vector<4x1xf32>
    %22 = vector.broadcast %21 : vector<4x1xf32> to vector<4x8xf32>
    %23 = arith.select %20, %22, %8 : vector<4x8xi1>, vector<4x8xf32>
    %24 = arith.index_cast %arg0 : i32 to index
    %c1 = arith.constant 1 : index
    %25 = memref.load %arg1[%24, %c1] : memref<2x8xi32, #tpu.memory_space<smem>>
    %26 = vector.broadcast %25 : i32 to vector<1x256xi32>
    %27 = arith.cmpi eq, %6, %26 : vector<1x256xi32>
    %cst_11 = arith.constant 0.000000e+00 : f32
    %28 = vector.shape_cast %27 : vector<1x256xi1> to vector<1x256xi1>
    %29 = vector.broadcast %28 : vector<1x256xi1> to vector<4x256xi1>
    %30 = vector.broadcast %cst_11 : f32 to vector<4x256xf32>
    %31 = arith.select %29, %1, %30 : vector<4x256xi1>, vector<4x256xf32>
    %cst_12 = arith.constant dense<0.000000e+00> : vector<4xf32>
    %32 = vector.multi_reduction <add>, %31, %cst_12 [1] : vector<4x256xf32> to vector<4xf32>
    %33 = vector.shape_cast %32 : vector<4xf32> to vector<4x1xf32>
    %c1_i32 = arith.constant 1 : i32
    %34 = vector.broadcast %c1_i32 : i32 to vector<4x8xi32>
    %35 = arith.cmpi eq, %7, %34 : vector<4x8xi32>
    %36 = vector.shape_cast %33 : vector<4x1xf32> to vector<4x1xf32>
    %37 = vector.broadcast %36 : vector<4x1xf32> to vector<4x8xf32>
    %38 = arith.select %35, %37, %23 : vector<4x8xi1>, vector<4x8xf32>
    %39 = arith.index_cast %arg0 : i32 to index
    %c2 = arith.constant 2 : index
    %40 = memref.load %arg1[%39, %c2] : memref<2x8xi32, #tpu.memory_space<smem>>
    %41 = vector.broadcast %40 : i32 to vector<1x256xi32>
    %42 = arith.cmpi eq, %6, %41 : vector<1x256xi32>
    %cst_13 = arith.constant 0.000000e+00 : f32
    %43 = vector.shape_cast %42 : vector<1x256xi1> to vector<1x256xi1>
    %44 = vector.broadcast %43 : vector<1x256xi1> to vector<4x256xi1>
    %45 = vector.broadcast %cst_13 : f32 to vector<4x256xf32>
    %46 = arith.select %44, %1, %45 : vector<4x256xi1>, vector<4x256xf32>
    %cst_14 = arith.constant dense<0.000000e+00> : vector<4xf32>
    %47 = vector.multi_reduction <add>, %46, %cst_14 [1] : vector<4x256xf32> to vector<4xf32>
    %48 = vector.shape_cast %47 : vector<4xf32> to vector<4x1xf32>
    %c2_i32 = arith.constant 2 : i32
    %49 = vector.broadcast %c2_i32 : i32 to vector<4x8xi32>
    %50 = arith.cmpi eq, %7, %49 : vector<4x8xi32>
    %51 = vector.shape_cast %48 : vector<4x1xf32> to vector<4x1xf32>
    %52 = vector.broadcast %51 : vector<4x1xf32> to vector<4x8xf32>
    %53 = arith.select %50, %52, %38 : vector<4x8xi1>, vector<4x8xf32>
    %54 = arith.index_cast %arg0 : i32 to index
    %c3 = arith.constant 3 : index
    %55 = memref.load %arg1[%54, %c3] : memref<2x8xi32, #tpu.memory_space<smem>>
    %56 = vector.broadcast %55 : i32 to vector<1x256xi32>
    %57 = arith.cmpi eq, %6, %56 : vector<1x256xi32>
    %cst_15 = arith.constant 0.000000e+00 : f32
    %58 = vector.shape_cast %57 : vector<1x256xi1> to vector<1x256xi1>
    %59 = vector.broadcast %58 : vector<1x256xi1> to vector<4x256xi1>
    %60 = vector.broadcast %cst_15 : f32 to vector<4x256xf32>
    %61 = arith.select %59, %1, %60 : vector<4x256xi1>, vector<4x256xf32>
    %cst_16 = arith.constant dense<0.000000e+00> : vector<4xf32>
    %62 = vector.multi_reduction <add>, %61, %cst_16 [1] : vector<4x256xf32> to vector<4xf32>
    %63 = vector.shape_cast %62 : vector<4xf32> to vector<4x1xf32>
    %c3_i32 = arith.constant 3 : i32
    %64 = vector.broadcast %c3_i32 : i32 to vector<4x8xi32>
    %65 = arith.cmpi eq, %7, %64 : vector<4x8xi32>
    %66 = vector.shape_cast %63 : vector<4x1xf32> to vector<4x1xf32>
    %67 = vector.broadcast %66 : vector<4x1xf32> to vector<4x8xf32>
    %68 = arith.select %65, %67, %53 : vector<4x8xi1>, vector<4x8xf32>
    %69 = arith.index_cast %arg0 : i32 to index
    %c4 = arith.constant 4 : index
    %70 = memref.load %arg1[%69, %c4] : memref<2x8xi32, #tpu.memory_space<smem>>
    %71 = vector.broadcast %70 : i32 to vector<1x256xi32>
    %72 = arith.cmpi eq, %6, %71 : vector<1x256xi32>
    %cst_17 = arith.constant 0.000000e+00 : f32
    %73 = vector.shape_cast %72 : vector<1x256xi1> to vector<1x256xi1>
    %74 = vector.broadcast %73 : vector<1x256xi1> to vector<4x256xi1>
    %75 = vector.broadcast %cst_17 : f32 to vector<4x256xf32>
    %76 = arith.select %74, %1, %75 : vector<4x256xi1>, vector<4x256xf32>
    %cst_18 = arith.constant dense<0.000000e+00> : vector<4xf32>
    %77 = vector.multi_reduction <add>, %76, %cst_18 [1] : vector<4x256xf32> to vector<4xf32>
    %78 = vector.shape_cast %77 : vector<4xf32> to vector<4x1xf32>
    %c4_i32 = arith.constant 4 : i32
    %79 = vector.broadcast %c4_i32 : i32 to vector<4x8xi32>
    %80 = arith.cmpi eq, %7, %79 : vector<4x8xi32>
    %81 = vector.shape_cast %78 : vector<4x1xf32> to vector<4x1xf32>
    %82 = vector.broadcast %81 : vector<4x1xf32> to vector<4x8xf32>
    %83 = arith.select %80, %82, %68 : vector<4x8xi1>, vector<4x8xf32>
    %84 = arith.index_cast %arg0 : i32 to index
    %c5 = arith.constant 5 : index
    %85 = memref.load %arg1[%84, %c5] : memref<2x8xi32, #tpu.memory_space<smem>>
    %86 = vector.broadcast %85 : i32 to vector<1x256xi32>
    %87 = arith.cmpi eq, %6, %86 : vector<1x256xi32>
    %cst_19 = arith.constant 0.000000e+00 : f32
    %88 = vector.shape_cast %87 : vector<1x256xi1> to vector<1x256xi1>
    %89 = vector.broadcast %88 : vector<1x256xi1> to vector<4x256xi1>
    %90 = vector.broadcast %cst_19 : f32 to vector<4x256xf32>
    %91 = arith.select %89, %1, %90 : vector<4x256xi1>, vector<4x256xf32>
    %cst_20 = arith.constant dense<0.000000e+00> : vector<4xf32>
    %92 = vector.multi_reduction <add>, %91, %cst_20 [1] : vector<4x256xf32> to vector<4xf32>
    %93 = vector.shape_cast %92 : vector<4xf32> to vector<4x1xf32>
    %c5_i32 = arith.constant 5 : i32
    %94 = vector.broadcast %c5_i32 : i32 to vector<4x8xi32>
    %95 = arith.cmpi eq, %7, %94 : vector<4x8xi32>
    %96 = vector.shape_cast %93 : vector<4x1xf32> to vector<4x1xf32>
    %97 = vector.broadcast %96 : vector<4x1xf32> to vector<4x8xf32>
    %98 = arith.select %95, %97, %83 : vector<4x8xi1>, vector<4x8xf32>
    %99 = arith.index_cast %arg0 : i32 to index
    %c6 = arith.constant 6 : index
    %100 = memref.load %arg1[%99, %c6] : memref<2x8xi32, #tpu.memory_space<smem>>
    %101 = vector.broadcast %100 : i32 to vector<1x256xi32>
    %102 = arith.cmpi eq, %6, %101 : vector<1x256xi32>
    %cst_21 = arith.constant 0.000000e+00 : f32
    %103 = vector.shape_cast %102 : vector<1x256xi1> to vector<1x256xi1>
    %104 = vector.broadcast %103 : vector<1x256xi1> to vector<4x256xi1>
    %105 = vector.broadcast %cst_21 : f32 to vector<4x256xf32>
    %106 = arith.select %104, %1, %105 : vector<4x256xi1>, vector<4x256xf32>
    %cst_22 = arith.constant dense<0.000000e+00> : vector<4xf32>
    %107 = vector.multi_reduction <add>, %106, %cst_22 [1] : vector<4x256xf32> to vector<4xf32>
    %108 = vector.shape_cast %107 : vector<4xf32> to vector<4x1xf32>
    %c6_i32 = arith.constant 6 : i32
    %109 = vector.broadcast %c6_i32 : i32 to vector<4x8xi32>
    %110 = arith.cmpi eq, %7, %109 : vector<4x8xi32>
    %111 = vector.shape_cast %108 : vector<4x1xf32> to vector<4x1xf32>
    %112 = vector.broadcast %111 : vector<4x1xf32> to vector<4x8xf32>
    %113 = arith.select %110, %112, %98 : vector<4x8xi1>, vector<4x8xf32>
    %114 = arith.index_cast %arg0 : i32 to index
    %c7 = arith.constant 7 : index
    %115 = memref.load %arg1[%114, %c7] : memref<2x8xi32, #tpu.memory_space<smem>>
    %116 = vector.broadcast %115 : i32 to vector<1x256xi32>
    %117 = arith.cmpi eq, %6, %116 : vector<1x256xi32>
    %cst_23 = arith.constant 0.000000e+00 : f32
    %118 = vector.shape_cast %117 : vector<1x256xi1> to vector<1x256xi1>
    %119 = vector.broadcast %118 : vector<1x256xi1> to vector<4x256xi1>
    %120 = vector.broadcast %cst_23 : f32 to vector<4x256xf32>
    %121 = arith.select %119, %1, %120 : vector<4x256xi1>, vector<4x256xf32>
    %cst_24 = arith.constant dense<0.000000e+00> : vector<4xf32>
    %122 = vector.multi_reduction <add>, %121, %cst_24 [1] : vector<4x256xf32> to vector<4xf32>
    %123 = vector.shape_cast %122 : vector<4xf32> to vector<4x1xf32>
    %c7_i32 = arith.constant 7 : i32
    %124 = vector.broadcast %c7_i32 : i32 to vector<4x8xi32>
    %125 = arith.cmpi eq, %7, %124 : vector<4x8xi32>
    %126 = vector.shape_cast %123 : vector<4x1xf32> to vector<4x1xf32>
    %127 = vector.broadcast %126 : vector<4x1xf32> to vector<4x8xf32>
    %128 = arith.select %125, %127, %113 : vector<4x8xi1>, vector<4x8xf32>
    %129 = arith.mulf %128, %3 : vector<4x8xf32>
    %130 = arith.mulf %5, %3 : vector<4x8xf32>
    %131 = arith.subf %129, %130 : vector<4x8xf32>
    %132 = math.absf %131 : vector<4x8xf32>
    %133 = vector.shape_cast %132 : vector<4x8xf32> to vector<1x4x8xf32>
    %cst_25 = arith.constant dense<0.000000e+00> : vector<1xf32>
    %134 = vector.multi_reduction <add>, %133, %cst_25 [1, 2] : vector<1x4x8xf32> to vector<1xf32>
    %135 = vector.shape_cast %134 : vector<1xf32> to vector<1x1x1xf32>
    %136 = vector.extract %135[0, 0, 0] : f32 from vector<1x1x1xf32>
    %137 = vector.shape_cast %3 : vector<4x8xf32> to vector<1x4x8xf32>
    %cst_26 = arith.constant dense<0.000000e+00> : vector<1xf32>
    %138 = vector.multi_reduction <add>, %137, %cst_26 [1, 2] : vector<1x4x8xf32> to vector<1xf32>
    %139 = vector.shape_cast %138 : vector<1xf32> to vector<1x1x1xf32>
    %140 = vector.extract %139[0, 0, 0] : f32 from vector<1x1x1xf32>
    %141 = tpu.iota {dimensions = array<i32: 2>} : vector<1x1x128xi32>
    %c0_i32_27 = arith.constant 0 : i32
    %142 = vector.broadcast %c0_i32_27 : i32 to vector<1x1x128xi32>
    %143 = arith.cmpi eq, %141, %142 : vector<1x1x128xi32>
    %c1_i32_28 = arith.constant 1 : i32
    %144 = vector.broadcast %c1_i32_28 : i32 to vector<1x1x128xi32>
    %145 = arith.cmpi eq, %141, %144 : vector<1x1x128xi32>
    %cst_29 = arith.constant 0.000000e+00 : f32
    %146 = vector.broadcast %140 : f32 to vector<1x1x128xf32>
    %147 = vector.broadcast %cst_29 : f32 to vector<1x1x128xf32>
    %148 = arith.select %145, %146, %147 : vector<1x1x128xi1>, vector<1x1x128xf32>
    %149 = vector.broadcast %136 : f32 to vector<1x1x128xf32>
    %150 = arith.select %143, %149, %148 : vector<1x1x128xi1>, vector<1x1x128xf32>
    %c0_30 = arith.constant 0 : index
    %c0_31 = arith.constant 0 : index
    %c0_32 = arith.constant 0 : index
    %151 = vector.load %arg5[%c0_30, %c0_31, %c0_32] : memref<1x1x128xf32, #tpu.memory_space<vmem>>, vector<1x1x128xf32>
    tpu.vector_store %arg5[%c0_30, %c0_31, %c0_32], %150 {strides = array<i32>} : memref<1x1x128xf32, #tpu.memory_space<vmem>>, vector<1x1x128xf32>,
    return
  }
  func.func @transform_0(%arg0: i32, %arg1: memref<2x8xi32, #tpu.memory_space<smem>>) -> (i32, i32, i32) {
    %c0_i32 = arith.constant 0 : i32
    %c0_i32_0 = arith.constant 0 : i32
    %c0_i32_1 = arith.constant 0 : i32
    return %arg0, %c0_i32, %c0_i32_0 : i32, i32, i32
  }
  func.func @transform_1(%arg0: i32, %arg1: memref<2x8xi32, #tpu.memory_space<smem>>) -> (i32, i32, i32) {
    %c0_i32 = arith.constant 0 : i32
    %c0_i32_0 = arith.constant 0 : i32
    %c0_i32_1 = arith.constant 0 : i32
    return %arg0, %c0_i32, %c0_i32_0 : i32, i32, i32
  }
  func.func @transform_2(%arg0: i32, %arg1: memref<2x8xi32, #tpu.memory_space<smem>>) -> (i32, i32, i32) {
    %c0_i32 = arith.constant 0 : i32
    %c0_i32_0 = arith.constant 0 : i32
    %c0_i32_1 = arith.constant 0 : i32
    return %arg0, %c0_i32, %c0_i32_0 : i32, i32, i32
  }
  func.func @transform_3(%arg0: i32, %arg1: memref<2x8xi32, #tpu.memory_space<smem>>) -> (i32, i32, i32) {
    %c0_i32 = arith.constant 0 : i32
    %c0_i32_0 = arith.constant 0 : i32
    %c0_i32_1 = arith.constant 0 : i32
    return %arg0, %c0_i32, %c0_i32_0 : i32, i32, i32
  }
}

</mosaic_0001>

<llo_original>
// kernel: tpu_custom_call.1
$region0: #{tpu_custom_call.1}
  #allocation0 [shape = 'u32[]', space=smem, size = 0x4, offset = 0x4, fixed_abs, tag = 'smem constant byte address 0x4 - core index']
  #allocation1 [shape = 'u32[144,128]{1,0:T(1,128)}', space=vmem, size = 0x12000, scoped, tag = 'internal scratch']
  #allocation2 [shape = 's32[1]{0}', space=sflag, size = 0x4, scoped, tag = 'scoped memory for tpu_custom_call.1']
  #allocation3 [shape = 'u8[1024]{0}', space=smem, size = 0x400, scoped, tag = 'prefetched SMEM operand 0']
  %s0 = inlined_call_operand.hbm [shape: s32[2,8], index: 0, kind: input, shape index: {}]
  %s1 = inlined_call_operand.hbm [shape: f32[2,4,256], index: 1, kind: input, shape index: {}]
  %s2 = inlined_call_operand.hbm [shape: f32[2,4,8], index: 2, kind: input, shape index: {}]
  %s3 = inlined_call_operand.hbm [shape: f32[2,4,8], index: 3, kind: input, shape index: {}]
  %s4 = inlined_call_operand.hbm [shape: f32[2,1,128], index: 4, kind: output, shape index: {}]
  %s5 = sld [smem:[#allocation0]]
  $region57: #{tpu_custom_call.1} parent=0
    _
  %s7 = ssub.s32 1, %s5
  %s8 = scalar_select 0, %s7, %s5
  %10 = dma.hbm_to_smem %s0, 32, [#allocation3], [#allocation2]
  %11 = dma.done [#allocation2], 32
  %12 = sfence
  $region1: #{tpu_custom_call.1} parent=0
    #allocation4 [shape = 'u8[8192]{0}', space=vmem, size = 0x2000, scoped, tag = 'input window, operand 1']
    #allocation5 [shape = 's32[2]{0}', space=sflag, size = 0x8, scoped, tag = 'scoped memory for tpu_custom_call.1']
    #allocation6 [shape = 's32[2]{0}', space=sflag, size = 0x8, scoped, tag = 'scoped memory for tpu_custom_call.1']
    #allocation7 [shape = 'u8[4096]{0}', space=vmem, size = 0x1000, scoped, tag = 'input window, operand 2']
    #allocation8 [shape = 's32[2]{0}', space=sflag, size = 0x8, scoped, tag = 'scoped memory for tpu_custom_call.1']
    #allocation9 [shape = 'u8[4096]{0}', space=vmem, size = 0x1000, scoped, tag = 'input window, operand 3']
    #allocation10 [shape = 'u8[1024]{0}', space=vmem, size = 0x400, scoped, tag = 'output window, operand 0']
    %13 = vsyncpa [#allocation5], 0
    %s14 = scalar_lea.sflag [#allocation5], 1
    %15 = vsyncpa %s14, 0
    %16 = vsyncpa [#allocation8], 0
    %s17 = scalar_lea.sflag [#allocation8], 1
    %18 = vsyncpa %s17, 0
    %19 = vsyncpa [#allocation6], 0
    %s20 = scalar_lea.sflag [#allocation6], 1
    %21 = vsyncpa %s20, 0
    loop: start=0, step=1, limit=4
    $region2: #{tpu_custom_call.1} parent=1 // loop_pre_header
      _
    $region3: #{tpu_custom_call.1} parent=1 // loop_header
      %s23 = sphi 0, %s27
      %p24 = scmp.ge.s32.totalorder %s23, 4
      %s33 = sphi 0, %s35
      %s36 = sphi 0, %s33
      %s37 = sphi 0, %s36
      %s53 = sphi 0, %s37
      %s59 = sphi 0, %s61
      %s62 = sphi 0, %s59
      %s63 = sphi 0, %s62
      %s79 = sphi 0, %s63
      %s85 = sphi 0, %s87
      %s88 = sphi 0, %s85
      %s89 = sphi 0, %s88
      %s105 = sphi 0, %s89
      %s111 = sphi 0, %s113
      %s114 = sphi 0, %s111
      %s115 = sphi 0, %s114
      %s131 = sphi 0, %s115
    $region4: #{tpu_custom_call.1} parent=1 // loop_header_branch
      %26 = sbr.rel (%p24) target = $region8
    $region5: #{tpu_custom_call.1} parent=1 // loop_body
      %s28 = ssub.s32 %s23, 1
      %s29 = ssub.s32 %s23, 2
      %s30 = sadd.s32 %s23, 1
      %s31 = ssub.s32 %s23, %s30
      %p32 = scmp.eq.s32.totalorder %s31, 0
      %s34 = sadd.s32 %s33, 1
      %s35 = scalar_select %p32, %s33, %s34
      %p38 = pneg %p32
      %p39 = scmp.eq.s32.totalorder %s23, 1
      %p40 = por %p38, %p39
      %p41 = scmp.ne.s32.totalorder %s33, %s36
      %p42 = scmp.eq.s32.totalorder %s23, 0
      %p43 = por %p41, %p42
      %p44 = scmp.ne.s32.totalorder %s33, %s36
      %p45 = scmp.eq.s32.totalorder %s28, 1
      %p46 = por %p44, %p45
      %p47 = scmp.ne.s32.totalorder %s36, %s37
      %p48 = scmp.eq.s32.totalorder %s28, 0
      %p49 = por %p47, %p48
      %p50 = scmp.ne.s32.totalorder %s36, %s37
      %p51 = scmp.eq.s32.totalorder %s29, 1
      %p52 = por %p50, %p51
      %p54 = scmp.ne.s32.totalorder %s37, %s53
      %p55 = scmp.eq.s32.totalorder %s29, 0
      %p56 = por %p54, %p55
      %s57 = ssub.s32 %s23, %s30
      %p58 = scmp.eq.s32.totalorder %s57, 0
      %s60 = sadd.s32 %s59, 1
      %s61 = scalar_select %p58, %s59, %s60
      %p64 = pneg %p58
      %p65 = scmp.eq.s32.totalorder %s23, 1
      %p66 = por %p64, %p65
      %p67 = scmp.ne.s32.totalorder %s59, %s62
      %p68 = scmp.eq.s32.totalorder %s23, 0
      %p69 = por %p67, %p68
      %p70 = scmp.ne.s32.totalorder %s59, %s62
      %p71 = scmp.eq.s32.totalorder %s28, 1
      %p72 = por %p70, %p71
      %p73 = scmp.ne.s32.totalorder %s62, %s63
      %p74 = scmp.eq.s32.totalorder %s28, 0
      %p75 = por %p73, %p74
      %p76 = scmp.ne.s32.totalorder %s62, %s63
      %p77 = scmp.eq.s32.totalorder %s29, 1
      %p78 = por %p76, %p77
      %p80 = scmp.ne.s32.totalorder %s63, %s79
      %p81 = scmp.eq.s32.totalorder %s29, 0
      %p82 = por %p80, %p81
      %s83 = ssub.s32 %s23, %s30
      %p84 = scmp.eq.s32.totalorder %s83, 0
      %s86 = sadd.s32 %s85, 1
      %s87 = scalar_select %p84, %s85, %s86
      %p90 = pneg %p84
      %p91 = scmp.eq.s32.totalorder %s23, 1
      %p92 = por %p90, %p91
      %p93 = scmp.ne.s32.totalorder %s85, %s88
      %p94 = scmp.eq.s32.totalorder %s23, 0
      %p95 = por %p93, %p94
      %p96 = scmp.ne.s32.totalorder %s85, %s88
      %p97 = scmp.eq.s32.totalorder %s28, 1
      %p98 = por %p96, %p97
      %p99 = scmp.ne.s32.totalorder %s88, %s89
      %p100 = scmp.eq.s32.totalorder %s28, 0
      %p101 = por %p99, %p100
      %p102 = scmp.ne.s32.totalorder %s88, %s89
      %p103 = scmp.eq.s32.totalorder %s29, 1
      %p104 = por %p102, %p103
      %p106 = scmp.ne.s32.totalorder %s89, %s105
      %p107 = scmp.eq.s32.totalorder %s29, 0
      %p108 = por %p106, %p107
      %s109 = ssub.s32 %s23, %s30
      %p110 = scmp.eq.s32.totalorder %s109, 0
      %s112 = sadd.s32 %s111, 1
      %s113 = scalar_select %p110, %s111, %s112
      %p116 = pneg %p110
      %p117 = scmp.eq.s32.totalorder %s23, 1
      %p118 = por %p116, %p117
      %p119 = scmp.ne.s32.totalorder %s111, %s114
      %p120 = scmp.eq.s32.totalorder %s23, 0
      %p121 = por %p119, %p120
      %p122 = scmp.ne.s32.totalorder %s111, %s114
      %p123 = scmp.eq.s32.totalorder %s28, 1
      %p124 = por %p122, %p123
      %p125 = scmp.ne.s32.totalorder %s114, %s115
      %p126 = scmp.eq.s32.totalorder %s28, 0
      %p127 = por %p125, %p126
      %p128 = scmp.ne.s32.totalorder %s114, %s115
      %p129 = scmp.eq.s32.totalorder %s29, 1
      %p130 = por %p128, %p129
      %p132 = scmp.ne.s32.totalorder %s115, %s131
      %p133 = scmp.eq.s32.totalorder %s29, 0
      %p134 = por %p132, %p133
      %p135 = scmp.le.s32.totalorder 1, %s23
      %p136 = scmp.lt.s32.totalorder %s23, 3
      %p137 = pnand %p135, %p136
      %p138 = pneg %p137
      // Predicated region
      $region9: #{tpu_custom_call.1} parent=5 // pred_check
        _
      $region10: #{tpu_custom_call.1} parent=5 // pred_check_branch
        %140 = sbr.rel (%p137) target = $region12
      $region11: #{tpu_custom_call.1} parent=5 // pred_region
        %s141 = ssub.s32 %s23, 1
      $region12: #{tpu_custom_call.1} parent=5 // pred_fallthru
        _
      %p142 = scmp.lt.s32.totalorder %s23, 2
      // Predicated region
      $region13: #{tpu_custom_call.1} parent=5 // pred_check
        %p143 = pneg %p142
      $region14: #{tpu_custom_call.1} parent=5 // pred_check_branch
        %145 = sbr.rel (%p143) target = $region16
      $region15: #{tpu_custom_call.1} parent=5 // pred_region
        // Predicated region
        $region17: #{tpu_custom_call.1} parent=15 // pred_check
          %p146 = pneg %p43
        $region18: #{tpu_custom_call.1} parent=15 // pred_check_branch
          %148 = sbr.rel (%p146) target = $region20
        $region19: #{tpu_custom_call.1} parent=15 // pred_region
          %s149 = sand.u32 %s33, 1
          %s150 = scalar_lea.sflag [#allocation5], %s149
          %s151 = sand.u32 %s33, 1
          %s152 = smul.addr %s151, 8
          %s153 = scalar_lea.vmem [#allocation4], %s152
          %s155 = ssub.s32 128, 128
          %156 = vsyncadd %s150, %s155
          %s157 = smul.addr %s23, 2
          %s158 = smul.addr %s157, 64
          %s159 = scalar_lea.hbm %s1, %s158
          %s161 = sshll.u32 %s153, 4
          %s162 = int_to_ptr.vmem [resolvable:$true] %s161
          %164 = dma.hbm_to_vmem [thread:$0]  %s159, 128, %s162, %s150
        $region20: #{tpu_custom_call.1} parent=15 // pred_fallthru
          _
        // Predicated region
        $region21: #{tpu_custom_call.1} parent=15 // pred_check
          %p165 = pneg %p69
        $region22: #{tpu_custom_call.1} parent=15 // pred_check_branch
          %167 = sbr.rel (%p165) target = $region24
        $region23: #{tpu_custom_call.1} parent=15 // pred_region
          %s168 = sand.u32 %s23, 1
          %s169 = scalar_lea.sflag [#allocation8], %s168
          %s170 = sand.u32 %s59, 1
          %s171 = smul.addr %s170, 4
          %s172 = scalar_lea.vmem [#allocation7], %s171
          %s174 = ssub.s32 64, 64
          %175 = vsyncadd %s169, %s174
          %s176 = smul.addr %s23, 64
          %s177 = scalar_lea.hbm %s2, %s176
          %s179 = sshll.u32 %s172, 4
          %s180 = int_to_ptr.vmem [resolvable:$true] %s179
          %182 = dma.hbm_to_vmem [thread:$0]  %s177, 64, %s180, %s169
        $region24: #{tpu_custom_call.1} parent=15 // pred_fallthru
          _
        // Predicated region
        $region25: #{tpu_custom_call.1} parent=15 // pred_check
          %p183 = pneg %p95
        $region26: #{tpu_custom_call.1} parent=15 // pred_check_branch
          %185 = sbr.rel (%p183) target = $region28
        $region27: #{tpu_custom_call.1} parent=15 // pred_region
          %s186 = sand.u32 %s23, 1
          %s187 = scalar_lea.sflag [#allocation8], %s186
          %s188 = sand.u32 %s85, 1
          %s189 = smul.addr %s188, 4
          %s190 = scalar_lea.vmem [#allocation9], %s189
          %s192 = ssub.s32 64, 64
          %193 = vsyncadd %s187, %s192
          %s194 = smul.addr %s23, 64
          %s195 = scalar_lea.hbm %s3, %s194
          %s197 = sshll.u32 %s190, 4
          %s198 = int_to_ptr.vmem [resolvable:$true] %s197
          %200 = dma.hbm_to_vmem [thread:$0]  %s195, 64, %s198, %s187
        $region28: #{tpu_custom_call.1} parent=15 // pred_fallthru
          _
      $region16: #{tpu_custom_call.1} parent=5 // pred_fallthru
        _
      %p201 = scmp.le.s32.totalorder 1, %s23
      %p202 = scmp.lt.s32.totalorder %s23, 3
      %p203 = pnand %p201, %p202
      %p204 = pneg %p203
      // Predicated region
      $region29: #{tpu_custom_call.1} parent=5 // pred_check
        _
      $region30: #{tpu_custom_call.1} parent=5 // pred_check_branch
        %206 = sbr.rel (%p203) target = $region32
      $region31: #{tpu_custom_call.1} parent=5 // pred_region
        %s207 = ssub.s32 %s23, 1
        %s208 = sand.u32 %s36, 1
        %s209 = scalar_lea.sflag [#allocation5], %s208
        %s210 = sand.u32 %s36, 1
        %s211 = smul.addr %s210, 8
        %s212 = scalar_lea.vmem [#allocation4], %s211
        // Predicated region
        $region33: #{tpu_custom_call.1} parent=31 // pred_check
          %p213 = pneg %p49
        $region34: #{tpu_custom_call.1} parent=31 // pred_check_branch
          %215 = sbr.rel (%p213) target = $region36
        $region35: #{tpu_custom_call.1} parent=31 // pred_region
          %216 = dma.done %s209, 128
        $region36: #{tpu_custom_call.1} parent=31 // pred_fallthru
          _
        %s217 = sand.u32 %s28, 1
        %s218 = scalar_lea.sflag [#allocation8], %s217
        %s219 = sand.u32 %s62, 1
        %s220 = smul.addr %s219, 4
        %s221 = scalar_lea.vmem [#allocation7], %s220
        // Predicated region
        $region37: #{tpu_custom_call.1} parent=31 // pred_check
          %p222 = pneg %p75
        $region38: #{tpu_custom_call.1} parent=31 // pred_check_branch
          %224 = sbr.rel (%p222) target = $region40
        $region39: #{tpu_custom_call.1} parent=31 // pred_region
          %225 = dma.done %s218, 64
        $region40: #{tpu_custom_call.1} parent=31 // pred_fallthru
          _
        %s226 = sand.u32 %s28, 1
        %s227 = scalar_lea.sflag [#allocation8], %s226
        %s228 = sand.u32 %s88, 1
        %s229 = smul.addr %s228, 4
        %s230 = scalar_lea.vmem [#allocation9], %s229
        // Predicated region
        $region41: #{tpu_custom_call.1} parent=31 // pred_check
          %p231 = pneg %p101
        $region42: #{tpu_custom_call.1} parent=31 // pred_check_branch
          %233 = sbr.rel (%p231) target = $region44
        $region43: #{tpu_custom_call.1} parent=31 // pred_region
          %234 = dma.done %s227, 64
        $region44: #{tpu_custom_call.1} parent=31 // pred_fallthru
          _
        %s235 = sand.u32 %s36, 1
        %s236 = scalar_lea.sflag [#allocation5], %s235
        %s237 = sand.u32 %s36, 1
        %s238 = smul.addr %s237, 8
        %s239 = scalar_lea.vmem [#allocation4], %s238
        %p240 = pneg %p49
        %p241 = pneg %p46
        %s242 = sand.u32 %s28, 1
        %s243 = scalar_lea.sflag [#allocation8], %s242
        %s244 = sand.u32 %s62, 1
        %s245 = smul.addr %s244, 4
        %s246 = scalar_lea.vmem [#allocation7], %s245
        %p247 = pneg %p75
        %p248 = pneg %p72
        %s249 = sand.u32 %s28, 1
        %s250 = scalar_lea.sflag [#allocation8], %s249
        %s251 = sand.u32 %s88, 1
        %s252 = smul.addr %s251, 4
        %s253 = scalar_lea.vmem [#allocation9], %s252
        %p254 = pneg %p101
        %p255 = pneg %p98
        %p256 = pneg %p127
        %p257 = pneg %p124
        %s258 = sand.u32 %s114, 1
        %s259 = scalar_lea.sflag [#allocation6], %s258
        %s260 = sand.u32 %s114, 1
        %s261 = scalar_lea.vmem [#allocation10], %s260
        %v262 = vld [vmem:[%s212] sm:$0xff]
        %v263 = vld [vmem:[%s221] sm:$0xf]
        %v264 = vld [vmem:[%s230] sm:$0xf]
        %v265 = vlaneseq
        %v266 = vand.u32 %v265, 127
        %v267 = vadd.s32 %v266, 128
        %s268 = smul.u32 %s28, 128
        %s269 = sld [smem:[#allocation3 + %s268]]
        %v270 = vstv %s269
        %vm271 = vcmp.eq.s32.totalorder %v266, %v270
        %vm272 = vcmp.eq.s32.totalorder %v267, %v270
        %v273 = vsel %vm271, 1, 0
        %v274 = vsel %vm272, 1, 0
        %vm275 = vcmp.eq.s32.totalorder %v273, 1
        %vm276 = vcmp.eq.s32.totalorder %v274, 1
        %v278 = vcombine.high %v262, %v262
        %v280 = vsel %vm275, %v262, 0.0
        %v281 = vsel %vm276, %v278, 0.0
        %vm282 = vcmask 1043456
        %v283 = vsel %vm282, %v280, 0.0
        %v284 = vsel %vm282, %v281, 0.0
        %v285 = vadd.f32 %v283, %v284
        %286 = vadd.xlane.f32.xlu0 %v285
        %v287 = vpop.xlane.xlu0 %286
        %vm288 = vcmp.eq.s32.totalorder %v266, 0
        %v289 = vsel %vm288, %v287, 0.0
        %s290 = sadd.s32 %s268, 1
        %s291 = sld [smem:[#allocation3 + %s290]]
        %v292 = vstv %s291
        %vm293 = vcmp.eq.s32.totalorder %v266, %v292
        %vm294 = vcmp.eq.s32.totalorder %v267, %v292
        %v295 = vsel %vm293, 1, 0
        %v296 = vsel %vm294, 1, 0
        %vm297 = vcmp.eq.s32.totalorder %v295, 1
        %vm298 = vcmp.eq.s32.totalorder %v296, 1
        %v299 = vsel %vm297, %v262, 0.0
        %v300 = vsel %vm298, %v278, 0.0
        %v301 = vsel %vm282, %v299, 0.0
        %v302 = vsel %vm282, %v300, 0.0
        %v303 = vadd.f32 %v301, %v302
        %304 = vadd.xlane.f32.xlu0 %v303
        %v305 = vpop.xlane.xlu0 %304
        %vm306 = vcmp.eq.s32.totalorder %v266, 1
        %v307 = vsel %vm306, %v305, %v289
        %s308 = sadd.s32 %s268, 2
        %s309 = sld [smem:[#allocation3 + %s308]]
        %v310 = vstv %s309
        %vm311 = vcmp.eq.s32.totalorder %v266, %v310
        %vm312 = vcmp.eq.s32.totalorder %v267, %v310
        %v313 = vsel %vm311, 1, 0
        %v314 = vsel %vm312, 1, 0
        %vm315 = vcmp.eq.s32.totalorder %v313, 1
        %vm316 = vcmp.eq.s32.totalorder %v314, 1
        %v317 = vsel %vm315, %v262, 0.0
        %v318 = vsel %vm316, %v278, 0.0
        %v319 = vsel %vm282, %v317, 0.0
        %v320 = vsel %vm282, %v318, 0.0
        %v321 = vadd.f32 %v319, %v320
        %322 = vadd.xlane.f32.xlu0 %v321
        %v323 = vpop.xlane.xlu0 %322
        %vm324 = vcmp.eq.s32.totalorder %v266, 2
        %v325 = vsel %vm324, %v323, %v307
        %s326 = sadd.s32 %s268, 3
        %s327 = sld [smem:[#allocation3 + %s326]]
        %v328 = vstv %s327
        %vm329 = vcmp.eq.s32.totalorder %v266, %v328
        %vm330 = vcmp.eq.s32.totalorder %v267, %v328
        %v331 = vsel %vm329, 1, 0
        %v332 = vsel %vm330, 1, 0
        %vm333 = vcmp.eq.s32.totalorder %v331, 1
        %vm334 = vcmp.eq.s32.totalorder %v332, 1
        %v335 = vsel %vm333, %v262, 0.0
        %v336 = vsel %vm334, %v278, 0.0
        %v337 = vsel %vm282, %v335, 0.0
        %v338 = vsel %vm282, %v336, 0.0
        %v339 = vadd.f32 %v337, %v338
        %340 = vadd.xlane.f32.xlu0 %v339
        %v341 = vpop.xlane.xlu0 %340
        %vm342 = vcmp.eq.s32.totalorder %v266, 3
        %v343 = vsel %vm342, %v341, %v325
        %s344 = sadd.s32 %s268, 4
        %s345 = sld [smem:[#allocation3 + %s344]]
        %v346 = vstv %s345
        %vm347 = vcmp.eq.s32.totalorder %v266, %v346
        %vm348 = vcmp.eq.s32.totalorder %v267, %v346
        %v349 = vsel %vm347, 1, 0
        %v350 = vsel %vm348, 1, 0
        %vm351 = vcmp.eq.s32.totalorder %v349, 1
        %vm352 = vcmp.eq.s32.totalorder %v350, 1
        %v353 = vsel %vm351, %v262, 0.0
        %v354 = vsel %vm352, %v278, 0.0
        %v355 = vsel %vm282, %v353, 0.0
        %v356 = vsel %vm282, %v354, 0.0
        %v357 = vadd.f32 %v355, %v356
        %358 = vadd.xlane.f32.xlu0 %v357
        %v359 = vpop.xlane.xlu0 %358
        %vm360 = vcmp.eq.s32.totalorder %v266, 4
        %v361 = vsel %vm360, %v359, %v343
        %s362 = sadd.s32 %s268, 5
        %s363 = sld [smem:[#allocation3 + %s362]]
        %v364 = vstv %s363
        %vm365 = vcmp.eq.s32.totalorder %v266, %v364
        %vm366 = vcmp.eq.s32.totalorder %v267, %v364
        %v367 = vsel %vm365, 1, 0
        %v368 = vsel %vm366, 1, 0
        %vm369 = vcmp.eq.s32.totalorder %v367, 1
        %vm370 = vcmp.eq.s32.totalorder %v368, 1
        %v371 = vsel %vm369, %v262, 0.0
        %v372 = vsel %vm370, %v278, 0.0
        %v373 = vsel %vm282, %v371, 0.0
        %v374 = vsel %vm282, %v372, 0.0
        %v375 = vadd.f32 %v373, %v374
        %376 = vadd.xlane.f32.xlu0 %v375
        %v377 = vpop.xlane.xlu0 %376
        %vm378 = vcmp.eq.s32.totalorder %v266, 5
        %v379 = vsel %vm378, %v377, %v361
        %s380 = sadd.s32 %s268, 6
        %s381 = sld [smem:[#allocation3 + %s380]]
        %v382 = vstv %s381
        %vm383 = vcmp.eq.s32.totalorder %v266, %v382
        %vm384 = vcmp.eq.s32.totalorder %v267, %v382
        %v385 = vsel %vm383, 1, 0
        %v386 = vsel %vm384, 1, 0
        %vm387 = vcmp.eq.s32.totalorder %v385, 1
        %vm388 = vcmp.eq.s32.totalorder %v386, 1
        %v389 = vsel %vm387, %v262, 0.0
        %v390 = vsel %vm388, %v278, 0.0
        %v391 = vsel %vm282, %v389, 0.0
        %v392 = vsel %vm282, %v390, 0.0
        %v393 = vadd.f32 %v391, %v392
        %394 = vadd.xlane.f32.xlu0 %v393
        %v395 = vpop.xlane.xlu0 %394
        %vm396 = vcmp.eq.s32.totalorder %v266, 6
        %v397 = vsel %vm396, %v395, %v379
        %s398 = sadd.s32 %s268, 7
        %s399 = sld [smem:[#allocation3 + %s398]]
        %v400 = vstv %s399
        %vm401 = vcmp.eq.s32.totalorder %v266, %v400
        %vm402 = vcmp.eq.s32.totalorder %v267, %v400
        %v403 = vsel %vm401, 1, 0
        %v404 = vsel %vm402, 1, 0
        %vm405 = vcmp.eq.s32.totalorder %v403, 1
        %vm406 = vcmp.eq.s32.totalorder %v404, 1
        %v407 = vsel %vm405, %v262, 0.0
        %v408 = vsel %vm406, %v278, 0.0
        %v409 = vsel %vm282, %v407, 0.0
        %v410 = vsel %vm282, %v408, 0.0
        %v411 = vadd.f32 %v409, %v410
        %412 = vadd.xlane.f32.xlu0 %v411
        %v413 = vpop.xlane.xlu0 %412
        %vm414 = vcmp.eq.s32.totalorder %v266, 7
        %v415 = vsel %vm414, %v413, %v397
        %v416 = vmul.f32 %v415, %v263
        %v417 = vmul.f32 %v264, %v263
        %v418 = vsub.f32 %v416, %v417
        %v419 = vand.u32 2147483647, %v418
        %vm420 = vcmask 60416
        %v421 = vsel %vm420, %v419, 0.0
        %422 = vadd.xlane.f32.xlu0 %v421
        %v423 = vpop.xlane.xlu0 %422
        %v424 = vrot.slane %v423, 4
        %v425 = vadd.f32 %v423, %v424
        %v426 = vrot.slane %v425, 2
        %v427 = vadd.f32 %v425, %v426
        %v428 = vrot.slane %v427, 1
        %v429 = vadd.f32 %v427, %v428
        %s430 = vtos %v429
        %v431 = vsel %vm420, %v263, 0.0
        %432 = vadd.xlane.f32.xlu0 %v431
        %v433 = vpop.xlane.xlu0 %432
        %v434 = vrot.slane %v433, 4
        %v435 = vadd.f32 %v433, %v434
        %v436 = vrot.slane %v435, 2
        %v437 = vadd.f32 %v435, %v436
        %v438 = vrot.slane %v437, 1
        %v439 = vadd.f32 %v437, %v438
        %s440 = vtos %v439
        %v441 = vstv %s440
        %v442 = vsel %vm306, %v441, 0.0
        %v443 = vstv %s430
        %v444 = vsel %vm288, %v443, %v442
        %445 = vst [vmem:[%s261] sm:$0x1] %v444
        %s446 = sand.u32 %s114, 1
        %s447 = scalar_lea.sflag [#allocation6], %s446
        %s448 = sand.u32 %s114, 1
        %s449 = scalar_lea.vmem [#allocation10], %s448
        // Predicated region
        $region45: #{tpu_custom_call.1} parent=31 // pred_check
          %p450 = pneg %p124
        $region46: #{tpu_custom_call.1} parent=31 // pred_check_branch
          %452 = sbr.rel (%p450) target = $region48
        $region47: #{tpu_custom_call.1} parent=31 // pred_region
          %s454 = ssub.s32 16, 16
          %455 = vsyncadd %s447, %s454
          %s456 = smul.addr %s28, 16
          %s457 = scalar_lea.hbm %s4, %s456
          %s459 = sshll.u32 %s449, 4
          %s460 = int_to_ptr.vmem [resolvable:$true] %s459
          %462 = dma.vmem_to_hbm [thread:$0]  %s460, 16, %s457, %s447
        $region48: #{tpu_custom_call.1} parent=31 // pred_fallthru
          _
      $region32: #{tpu_custom_call.1} parent=5 // pred_fallthru
        _
      %p463 = scmp.le.s32.totalorder 2, %s23
      // Predicated region
      $region49: #{tpu_custom_call.1} parent=5 // pred_check
        %p464 = pneg %p463
      $region50: #{tpu_custom_call.1} parent=5 // pred_check_branch
        %466 = sbr.rel (%p464) target = $region52
      $region51: #{tpu_custom_call.1} parent=5 // pred_region
        %s467 = ssub.s32 %s23, 2
        // Predicated region
        $region53: #{tpu_custom_call.1} parent=51 // pred_check
          %p468 = pneg %p130
        $region54: #{tpu_custom_call.1} parent=51 // pred_check_branch
          %470 = sbr.rel (%p468) target = $region56
        $region55: #{tpu_custom_call.1} parent=51 // pred_region
          %s471 = sand.u32 %s115, 1
          %s472 = scalar_lea.sflag [#allocation6], %s471
          %s473 = sand.u32 %s115, 1
          %s474 = scalar_lea.vmem [#allocation10], %s473
          %475 = dma.done %s472, 16
        $region56: #{tpu_custom_call.1} parent=51 // pred_fallthru
          _
      $region52: #{tpu_custom_call.1} parent=5 // pred_fallthru
        _
    $region6: #{tpu_custom_call.1} parent=1 // loop_footer
      %s27 = sadd.s32 1, %s23
    $region7: #{tpu_custom_call.1} parent=1 // loop_footer_branch
      %22 = sbr.rel target = $region3
    $region8: #{tpu_custom_call.1} parent=1 // loop_exit
      _
    %476 = vsyncpa [#allocation5], 1
    %s477 = scalar_lea.sflag [#allocation5], 1
    %478 = vsyncpa %s477, 1
    %479 = vsyncpa [#allocation8], 1
    %s480 = scalar_lea.sflag [#allocation8], 1
    %481 = vsyncpa %s480, 1
    %482 = vsyncpa [#allocation6], 1
    %s483 = scalar_lea.sflag [#allocation6], 1
    %484 = vsyncpa %s483, 1

</llo_original>
